<compile_context>
chip_gen: v7x
topology: tpu7x:2x2x1
jax: 0.10.0
libtpu: 0.0.40
codegen_flags: <defaults>
</compile_context>

<pallas_src>
import re
from functools import partial

import jax
import jax.numpy as jnp
from jax.experimental import pallas as pl
from jax.experimental.pallas import tpu as pltpu

_LANE = 128


def _tpu_generation():
    """Best-effort TPU generation number (5, 6, 7, ...), or None if unknown."""
    try:
        kind = jax.devices()[0].device_kind.lower()
    except Exception:
        return None
    m = re.search(r"(\d+)", kind)
    return int(m.group(1)) if m else None


def _sigmoid_kernel(x_ref, o_ref, *, compute_f32):
    # Elementwise sigmoid on the current VMEM tile.
    # tanh formulation: one EUP transcendental + VPU mul/add, no divide.
    x = x_ref[...]
    if compute_f32 and x.dtype != jnp.float32:
        x = x.astype(jnp.float32)
    y = jnp.tanh(x * 0.5) * 0.5 + 0.5
    o_ref[...] = y.astype(o_ref.dtype)


def _sigmoid_2d(x2d):
    """Tiled, pipelined sigmoid over a lane-dense (rows, 128) slab."""
    rows = x2d.shape[0]
    dtype = x2d.dtype
    itemsize = jnp.dtype(dtype).itemsize
    # Sublane granule for block divisibility: 8 (f32), 16 (bf16), 32 (int8).
    granule = max(8, 32 // itemsize)
    gen = _tpu_generation()

    # Chip-aware row-tile size (per-step overhead amortization vs scoped VMEM):
    #   v5e: 2 MiB f32 tiles (16 MiB scoped default is tight)
    #   v6e / v7x / unknown: 4 MiB f32 tiles
    tr = 4096 if (gen is not None and gen <= 5) else 8192

    # Keep the f32 upcast unless the chip has bf16 VPU/EUP (v6e+) and the
    # input is already bf16.
    compute_f32 = not (dtype == jnp.bfloat16 and gen is not None and gen >= 6)

    if rows > tr:
        block_rows = tr
        grid = (pl.cdiv(rows, tr),)
    elif gen is not None and gen >= 7 and rows >= 2 * granule and rows >= 512:
        # Dual-TensorCore chips: split mid-sized inputs into >=2 blocks so the
        # "parallel" grid axis can be sharded across both cores.
        half = pl.cdiv(rows, 2)
        block_rows = ((half + granule - 1) // granule) * granule
        grid = (pl.cdiv(rows, block_rows),)
    else:
        block_rows = rows          # full-extent block (always legal)
        grid = (1,)

    tile_bytes = block_rows * _LANE * itemsize
    # input + output, double-buffered, plus headroom for internal scratch.
    vmem_limit = max(32 << 20, 4 * tile_bytes + (8 << 20))
    # Cap below physical VMEM (v7x: 64 MiB; v5e/v6e: 128 MiB).
    vmem_limit = min(vmem_limit, (48 << 20) if (gen is None or gen >= 7) else (96 << 20))

    total = rows * _LANE
    cost = pl.CostEstimate(
        flops=2 * total,
        transcendentals=total,
        bytes_accessed=2 * total * itemsize,
    )

    return pl.pallas_call(
        partial(_sigmoid_kernel, compute_f32=compute_f32),
        out_shape=jax.ShapeDtypeStruct((rows, _LANE), dtype),
        grid=grid,
        in_specs=[pl.BlockSpec((block_rows, _LANE), lambda i: (i, 0))],
        out_specs=pl.BlockSpec((block_rows, _LANE), lambda i: (i, 0)),
        compiler_params=pltpu.CompilerParams(
            dimension_semantics=("parallel",),
            vmem_limit_bytes=vmem_limit,
        ),
        cost_estimate=cost,
    )(x2d)


def sigmoid_pallas(x):
    """Applies sigmoid(x) via a Pallas TPU kernel. Matches TestModel.forward."""
    orig_shape = x.shape
    n = x.size
    if n == 0:
        return x

    flat = x.reshape(-1)
    main = (n // _LANE) * _LANE

    if main == n:
        # Fast path: no padding, no slicing — pure (free) reshapes.
        out2d = _sigmoid_2d(flat.reshape(n // _LANE, _LANE))
        return out2d.reshape(orig_shape)

    if main == 0:
        # Tiny tensor (< 128 elements): a kernel launch isn't worth it.
        return jax.nn.sigmoid(x)

    # Ragged size: kernel on the lane-aligned prefix, pure-JAX on the <128
    # element tail (avoids full-array pad + slice HBM passes).
    head = _sigmoid_2d(flat[:main].reshape(main // _LANE, _LANE)).reshape(-1)
    tail = jax.nn.sigmoid(flat[main:])
    return jnp.concatenate([head, tail]).reshape(orig_shape)


if __name__ == "__main__":
    key = jax.random.PRNGKey(0)
    # Small NCHW input consistent with a generic image-like forward pass.
    x = jax.random.normal(key, (2, 4, 16, 16), dtype=jnp.float32)

    y = sigmoid_pallas(x)
    y = jax.block_until_ready(y)

    # Sanity check against pure-JAX reference.
    ref = jax.nn.sigmoid(x)
    assert y.shape == ref.shape and y.dtype == ref.dtype
    assert jnp.allclose(y, ref, atol=1e-6, rtol=1e-6), "mismatch vs reference"

    print("KERNEL_OK")
</pallas_src>

<mosaic_0001>
module attributes {stable_mosaic.version = 11 : i64} {
  func.func @_sigmoid_kernel(%arg0: i32, %arg1: memref<16x128xf32, #tpu.memory_space<vmem>>, %arg2: memref<16x128xf32, #tpu.memory_space<vmem>>) attributes {dimension_semantics = [#tpu.dimension_semantics<parallel>], iteration_bounds = array<i64: 1>, scalar_prefetch = 0 : i64, scratch_operands = 0 : i64, tpu.core_type = #tpu.core_type<tc>, window_params = [{transform_indices = @transform_0, window_bounds = array<i64: 16, 128>}, {transform_indices = @transform_1, window_bounds = array<i64: 16, 128>}]} {
    %c0 = arith.constant 0 : index
    %c0_0 = arith.constant 0 : index
    %0 = vector.load %arg1[%c0, %c0_0] : memref<16x128xf32, #tpu.memory_space<vmem>>, vector<16x128xf32>
    %cst = arith.constant 5.000000e-01 : f32
    %1 = vector.broadcast %cst : f32 to vector<16x128xf32>
    %2 = arith.mulf %0, %1 : vector<16x128xf32>
    %3 = math.tanh %2 : vector<16x128xf32>
    %cst_1 = arith.constant 5.000000e-01 : f32
    %4 = vector.broadcast %cst_1 : f32 to vector<16x128xf32>
    %5 = arith.mulf %3, %4 : vector<16x128xf32>
    %cst_2 = arith.constant 5.000000e-01 : f32
    %6 = vector.broadcast %cst_2 : f32 to vector<16x128xf32>
    %7 = arith.addf %5, %6 : vector<16x128xf32>
    %c0_3 = arith.constant 0 : index
    %c0_4 = arith.constant 0 : index
    %8 = vector.load %arg2[%c0_3, %c0_4] : memref<16x128xf32, #tpu.memory_space<vmem>>, vector<16x128xf32>
    tpu.vector_store %arg2[%c0_3, %c0_4], %7 {strides = array<i32>} : memref<16x128xf32, #tpu.memory_space<vmem>>, vector<16x128xf32>,
    return
  }
  func.func @transform_0(%arg0: i32) -> (i32, i32) {
    %c0_i32 = arith.constant 0 : i32
    %c0_i32_0 = arith.constant 0 : i32
    return %arg0, %c0_i32 : i32, i32
  }
  func.func @transform_1(%arg0: i32) -> (i32, i32) {
    %c0_i32 = arith.constant 0 : i32
    %c0_i32_0 = arith.constant 0 : i32
    return %arg0, %c0_i32 : i32, i32
  }
}

</mosaic_0001>

<llo_original>
// kernel: tpu_custom_call.1
$region0: #{tpu_custom_call.1}
  #allocation0 [shape = 'u32[]', space=smem, size = 0x4, offset = 0x4, fixed_abs, tag = 'smem constant byte address 0x4 - core index']
  #allocation1 [shape = 'u32[144,128]{1,0:T(1,128)}', space=vmem, size = 0x12000, scoped, tag = 'internal scratch']
  %s0 = inlined_call_operand.hbm [shape: f32[16,128], index: 0, kind: input, shape index: {}]
  %s1 = inlined_call_operand.hbm [shape: f32[16,128], index: 1, kind: output, shape index: {}]
  %s2 = sld [smem:[#allocation0]]
  $region18: #{tpu_custom_call.1} parent=0
    _
  %s4 = ssub.s32 1, %s2
  %s5 = scalar_select 0, %s4, %s2
  $region1: #{tpu_custom_call.1} parent=0
    #allocation2 [shape = 'u8[8192]{0}', space=vmem, size = 0x2000, scoped, tag = 'input window, operand 0, single buffered']
    #allocation3 [shape = 's32[1]{0}', space=sflag, size = 0x4, scoped, tag = 'scoped memory for tpu_custom_call.1']
    #allocation4 [shape = 's32[1]{0}', space=sflag, size = 0x4, scoped, tag = 'scoped memory for tpu_custom_call.1']
    #allocation5 [shape = 'u8[8192]{0}', space=vmem, size = 0x2000, scoped, tag = 'output window, operand 0, single buffered']
    %6 = vsyncpa [#allocation3], 0
    %7 = vsyncpa [#allocation4], 0
    // Predicated region
    $region2: #{tpu_custom_call.1} parent=1 // pred_check
      _
    $region3: #{tpu_custom_call.1} parent=1 // pred_check_branch
      %9 = sbr.rel (0) target = $region5
    $region4: #{tpu_custom_call.1} parent=1 // pred_region
      %s11 = ssub.s32 256, 256
      %12 = vsyncadd [#allocation3], %s11
      %s13 = sshll.u32 [#allocation2], 4
      %s14 = int_to_ptr.vmem [resolvable:$true] %s13
      %19 = dma.hbm_to_vmem [thread:$0]  %s0, 256, %s14, [#allocation3], 128, 128, 8
    $region5: #{tpu_custom_call.1} parent=1 // pred_fallthru
      _
    // Predicated region
    $region6: #{tpu_custom_call.1} parent=1 // pred_check
      _
    $region7: #{tpu_custom_call.1} parent=1 // pred_check_branch
      %21 = sbr.rel (0) target = $region9
    $region8: #{tpu_custom_call.1} parent=1 // pred_region
      %22 = dma.done [#allocation3], 256
    $region9: #{tpu_custom_call.1} parent=1 // pred_fallthru
      _
    %v23 = vld [vmem:[#allocation2] sm:$0xff]
    %v24 = vld [vmem:[#allocation2 + $0x8] sm:$0xff]
    %v25 = vmul.f32 %v23, 0.5
    %v26 = vmul.f32 %v24, 0.5
    %v27 = vtanh.pop %v25
    %v28 = vtanh.pop %v26
    %v29 = vmul.f32 %v27, 0.5
    %v30 = vmul.f32 %v28, 0.5
    %v31 = vadd.f32 %v29, 0.5
    %v32 = vadd.f32 %v30, 0.5
    %33 = vst [vmem:[#allocation5] sm:$0xff] %v31
    %34 = vst [vmem:[#allocation5 + $0x8] sm:$0xff] %v32
    // Predicated region
    $region10: #{tpu_custom_call.1} parent=1 // pred_check
      _
    $region11: #{tpu_custom_call.1} parent=1 // pred_check_branch
      %36 = sbr.rel (0) target = $region13
    $region12: #{tpu_custom_call.1} parent=1 // pred_region
      %s38 = ssub.s32 256, 256
      %39 = vsyncadd [#allocation4], %s38
      %s40 = sshll.u32 [#allocation5], 4
      %s41 = int_to_ptr.vmem [resolvable:$true] %s40
      %46 = dma.vmem_to_hbm [thread:$0]  %s41, 256, %s1, [#allocation4], 128, 128, 8
    $region13: #{tpu_custom_call.1} parent=1 // pred_fallthru
      _
    // Predicated region
    $region14: #{tpu_custom_call.1} parent=1 // pred_check
      _
    $region15: #{tpu_custom_call.1} parent=1 // pred_check_branch
      %48 = sbr.rel (0) target = $region17
    $region16: #{tpu_custom_call.1} parent=1 // pred_region
      %49 = dma.done [#allocation4], 256
    $region17: #{tpu_custom_call.1} parent=1 // pred_fallthru
      _
    %50 = vsyncpa [#allocation3], 1
    %51 = vsyncpa [#allocation4], 1

</llo_original>
